<compile_context>
chip_gen: v7x
topology: tpu7x:2x2x1
jax: 0.10.0
libtpu: 0.0.40
codegen_flags: <defaults>
</compile_context>

<pallas_src>
import jax
import jax.numpy as jnp
from jax import lax
from jax.experimental import pallas as pl
from jax.experimental.pallas import tpu as pltpu


def spatial_attention_kernel(slab_ref, w_ref, o_ref):
    """One (batch, lane-tile) block: fused K=2*k*k conv matmul + sigmoid.

    slab_ref: (1, 2*k*k, TN) bf16  pooled-map im2col taps (avg rows, then max)
    w_ref:    (1, 2*k*k)     bf16  concatenated conv weights
    o_ref:    (1, 1, TN)     f32   sigmoid(conv) output tile
    """
    logits = lax.dot_general(
        w_ref[...], slab_ref[0],
        dimension_numbers=(((1,), (0,)), ((), ())),
        preferred_element_type=jnp.float32)                    # (1, TN) f32
    # exp and reciprocal both run on the (otherwise idle) EUP slot.
    o_ref[0] = pl.reciprocal(1.0 + jnp.exp(-logits), approx=True)


def _build_pooled_tap_slab(pooled, ksize):
    """(B, 2, H, W) pooled map -> (B, 2*k*k, H*W) shifted-window tap slab.

    Pure XLA layout plumbing (pad + static slices + concat).  Zero-padding the
    pooled map is exactly the conv's zero padding.  Row order is
    (channel, kh, kw) row-major, matching conv_w[0].reshape(-1).
    """
    B, _, H, W = pooled.shape
    pad = ksize // 2
    pp = jnp.pad(pooled, ((0, 0), (0, 0), (pad, pad), (pad, pad)))
    taps = []
    for c in range(2):
        for kh in range(ksize):
            for kw in range(ksize):
                taps.append(
                    lax.slice(pp, (0, c, kh, kw), (B, c + 1, kh + H, kw + W)))
    return jnp.concatenate(taps, axis=1).reshape(B, 2 * ksize * ksize, H * W)
    # TODO(synk): for very large H*W, stream halo'd row-bands of the pooled map
    # (memory_space=pl.ANY + pltpu.make_async_copy) instead of materializing
    # the 49x tap slab, to remove the remaining ~49x HBM amplification.


def _pick_lane_tile(n_padded, batch, row_bytes, *, vmem_budget=6 << 20,
                    min_steps=8):
    """Largest lane tile (multiple of 128 dividing n_padded) whose
    double-buffered slab block fits `vmem_budget`; among those, prefer tiles
    that still yield >= min_steps total grid steps (keeps v7x's two TensorCores
    fed and BlockSpec pipelining active).  Tiny problems fall back to the
    smallest legal tile (maximizes step count)."""
    cands = [t for t in range(128, n_padded + 1, 128)
             if n_padded % t == 0 and 2 * row_bytes * t <= vmem_budget]
    if not cands:
        return 128
    good = [t for t in cands if batch * (n_padded // t) >= min_steps]
    return max(good) if good else min(cands)


@jax.jit
def spatial_attention(x, conv_w):
    """x: (B, C, H, W) f32.  conv_w: (1, 2, k, k) f32 (PyTorch OIHW, no bias)."""
    B, C, H, W = x.shape
    ksize = conv_w.shape[-1]
    kk2 = 2 * ksize * ksize
    N = H * W

    # 1) Channel pooling FIRST (XLA reduce): the kernel never sees the raw
    #    C-channel input, cutting its DMA traffic by ~Cx.
    avg = jnp.mean(x, axis=1)                                   # (B, H, W)
    mx = jnp.max(x, axis=1)                                     # (B, H, W)
    pooled = jnp.stack([avg, mx], axis=1)                       # (B, 2, H, W)

    # 2) im2col on the pooled map only; pad the pixel axis to a multiple of
    #    128 so every tile is lane-dense (unmasked full-lane stores).
    slab = _build_pooled_tap_slab(pooled, ksize)                # (B, kk2, N)
    n_pad = (-N) % 128
    if n_pad:
        slab = jnp.pad(slab, ((0, 0), (0, 0), (0, n_pad)))
    Np = N + n_pad
    slab = slab.astype(jnp.bfloat16)                            # halve HBM reads
    wcat = conv_w[0].reshape(1, kk2).astype(jnp.bfloat16)       # (1, kk2)

    # 3) Tile the pixel axis: VMEM-aware and with enough steps for pipelining.
    row_bytes = kk2 * slab.dtype.itemsize                       # bytes / lane col
    tile_n = _pick_lane_tile(Np, B, row_bytes)
    grid = (B, Np // tile_n)

    # Per-step working set (double-buffered slab + output + weights) with
    # headroom, clamped to [16 MiB, 32 MiB] so it never undercuts any
    # generation's scoped-VMEM default and stays inside v7x's 64 MiB physical.
    vmem_need = 2 * (kk2 * tile_n * 2 + tile_n * 4 + kk2 * 2)
    vmem_limit = int(min(32 << 20, max(16 << 20, 2 * vmem_need)))

    out = pl.pallas_call(
        spatial_attention_kernel,
        out_shape=jax.ShapeDtypeStruct((B, 1, Np), jnp.float32),
        grid=grid,
        in_specs=[
            pl.BlockSpec((1, kk2, tile_n), lambda b, j: (b, 0, j)),
            pl.BlockSpec((1, kk2), lambda b, j: (0, 0)),
        ],
        out_specs=pl.BlockSpec((1, 1, tile_n), lambda b, j: (b, 0, j)),
        compiler_params=pltpu.CompilerParams(
            dimension_semantics=("parallel", "parallel"),
            vmem_limit_bytes=vmem_limit),
    )(slab, wcat)

    return out[:, :, :N].reshape(B, 1, H, W)


def reference(x, conv_w):
    """Pure-JAX mirror of the PyTorch forward."""
    avg = jnp.mean(x, axis=1, keepdims=True)
    mx = jnp.max(x, axis=1, keepdims=True)
    cat = jnp.concatenate([avg, mx], axis=1)                    # (B, 2, H, W)
    pad = conv_w.shape[-1] // 2
    y = lax.conv_general_dilated(
        cat, conv_w, window_strides=(1, 1),
        padding=((pad, pad), (pad, pad)),
        dimension_numbers=("NCHW", "OIHW", "NCHW"),
        precision=lax.Precision.HIGHEST)
    return jax.nn.sigmoid(y)


if __name__ == "__main__":
    B, C, H, W = 2, 4, 16, 16
    ksize = 7

    key = jax.random.PRNGKey(0)
    kx, kw = jax.random.split(key)
    x = jax.random.normal(kx, (B, C, H, W), jnp.float32)
    conv_w = 0.1 * jax.random.normal(kw, (1, 2, ksize, ksize), jnp.float32)

    out = jax.block_until_ready(spatial_attention(x, conv_w))

    ref = reference(x, conv_w)
    err = float(jnp.max(jnp.abs(out - ref)))
    assert out.shape == (B, 1, H, W), out.shape
    # bf16 MXU operands (f32 accumulation) + approx EUP reciprocal vs the
    # HIGHEST-precision f32 reference -> allow a little rounding slack.
    assert err < 2e-2, f"max abs err {err}"

    print("KERNEL_OK")
</pallas_src>

<mosaic_0001>
module attributes {stable_mosaic.version = 11 : i64} {
  func.func @spatial_attention_kernel(%arg0: i32, %arg1: i32, %arg2: memref<1x98x128xbf16, #tpu.memory_space<vmem>>, %arg3: memref<1x98xbf16, #tpu.memory_space<vmem>>, %arg4: memref<1x1x128xf32, #tpu.memory_space<vmem>>) attributes {dimension_semantics = [#tpu.dimension_semantics<parallel>, #tpu.dimension_semantics<parallel>], iteration_bounds = array<i64: 2, 2>, scalar_prefetch = 0 : i64, scratch_operands = 0 : i64, tpu.core_type = #tpu.core_type<tc>, window_params = [{transform_indices = @transform_0, window_bounds = array<i64: 1, 98, 128>}, {pipeline_mode = #tpu.pipeline_mode<synchronous>, transform_indices = @transform_1, window_bounds = array<i64: 1, 98>}, {transform_indices = @transform_2, window_bounds = array<i64: 1, 1, 128>}]} {
    %c0 = arith.constant 0 : index
    %c0_0 = arith.constant 0 : index
    %0 = vector.load %arg3[%c0, %c0_0] : memref<1x98xbf16, #tpu.memory_space<vmem>>, vector<1x98xbf16>
    %c0_1 = arith.constant 0 : index
    %c0_2 = arith.constant 0 : index
    %c0_3 = arith.constant 0 : index
    %1 = vector.load %arg2[%c0_1, %c0_2, %c0_3] : memref<1x98x128xbf16, #tpu.memory_space<vmem>>, vector<1x98x128xbf16>
    %2 = vector.shape_cast %1 : vector<1x98x128xbf16> to vector<98x128xbf16>
    %cst = arith.constant dense<0.000000e+00> : vector<1x128xf32>
    %3 = tpu.matmul %0, %2, %cst {dimension_numbers = #tpu.dot_dimension_numbers<[1], [0], [0], [1], [0, 0, 1, 1], [], []>} : vector<1x98xbf16>, vector<98x128xbf16>, vector<1x128xf32> -> vector<1x128xf32>
    %cst_4 = arith.constant 0.000000e+00 : f32
    %4 = vector.broadcast %cst_4 : f32 to vector<1x128xf32>
    %5 = arith.subf %4, %3 : vector<1x128xf32>
    %6 = math.exp %5 : vector<1x128xf32>
    %cst_5 = arith.constant 1.000000e+00 : f32
    %7 = vector.broadcast %cst_5 : f32 to vector<1x128xf32>
    %8 = arith.addf %7, %6 : vector<1x128xf32>
    %9 = tpu.reciprocal %8 {approx = true} : vector<1x128xf32> -> vector<1x128xf32>
    %c0_6 = arith.constant 0 : index
    %c0_7 = arith.constant 0 : index
    %c0_8 = arith.constant 0 : index
    %10 = vector.load %arg4[%c0_6, %c0_7, %c0_8] : memref<1x1x128xf32, #tpu.memory_space<vmem>>, vector<1x1x128xf32>
    %11 = vector.shape_cast %10 : vector<1x1x128xf32> to vector<1x128xf32>
    %12 = vector.shape_cast %9 : vector<1x128xf32> to vector<1x1x128xf32>
    tpu.vector_store %arg4[%c0_6, %c0_7, %c0_8], %12 {strides = array<i32>} : memref<1x1x128xf32, #tpu.memory_space<vmem>>, vector<1x1x128xf32>,
    return
  }
  func.func @transform_0(%arg0: i32, %arg1: i32) -> (i32, i32, i32) {
    %c0_i32 = arith.constant 0 : i32
    %c0_i32_0 = arith.constant 0 : i32
    return %arg0, %c0_i32, %arg1 : i32, i32, i32
  }
  func.func @transform_1(%arg0: i32, %arg1: i32) -> (i32, i32) {
    %c0_i32 = arith.constant 0 : i32
    %c0_i32_0 = arith.constant 0 : i32
    %c0_i32_1 = arith.constant 0 : i32
    return %c0_i32, %c0_i32_0 : i32, i32
  }
  func.func @transform_2(%arg0: i32, %arg1: i32) -> (i32, i32, i32) {
    %c0_i32 = arith.constant 0 : i32
    %c0_i32_0 = arith.constant 0 : i32
    return %arg0, %c0_i32, %arg1 : i32, i32, i32
  }
}

</mosaic_0001>

<llo_original>
// kernel: spatial_attention.1
$region0: #{spatial_attention.1}
  #allocation0 [shape = 'u32[]', space=smem, size = 0x4, offset = 0x4, fixed_abs, tag = 'smem constant byte address 0x4 - core index']
  #allocation1 [shape = 'u32[144,128]{1,0:T(1,128)}', space=vmem, size = 0x12000, scoped, tag = 'internal scratch']
  %s0 = inlined_call_operand.vmem [shape: bf16[2,98,256], index: 0, kind: input, shape index: {}]
  %s1 = inlined_call_operand.vmem [shape: bf16[1,98], index: 1, kind: input, shape index: {}]
  %s2 = inlined_call_operand.vmem [shape: f32[2,1,256], index: 2, kind: output, shape index: {}]
  %s3 = sld [smem:[#allocation0]]
  $region82: #{spatial_attention.1} parent=0
    _
  %s5 = ssub.s32 1, %s3
  %s6 = scalar_select 0, %s5, %s3
  $region1: #{spatial_attention.1} parent=0
    #allocation2 [shape = 'u8[53248]{0}', space=vmem, size = 0xd000, scoped, tag = 'input window, operand 0']
    loop: start=0, step=1, limit=6
    $region2: #{spatial_attention.1} parent=1 // loop_pre_header
      _
    $region3: #{spatial_attention.1} parent=1 // loop_header
      %s8 = sphi 0, %s12
      %p9 = scmp.ge.s32.totalorder %s8, 6
      %s15 = sphi 0, %s27
      %s16 = sphi 0, %s23
      %s17 = sphi 0, %s15
      %s18 = sphi 0, %s16
      %s19 = sphi 0, %s17
      %s20 = sphi 0, %s18
      %s32 = sphi 0, %s34
      %s35 = sphi 0, %s32
      %s36 = sphi 0, %s35
      %s52 = sphi 0, %s36
      %s56 = sphi 0, %s56
      %s58 = sphi 0, %s56
      %s59 = sphi 0, %s58
      %s73 = sphi 0, %s59
      %s81 = sphi 0, %s83
      %s84 = sphi 0, %s81
      %s85 = sphi 0, %s84
      %s101 = sphi 0, %s85
    $region4: #{spatial_attention.1} parent=1 // loop_header_branch
      %11 = sbr.rel (%p9) target = $region8
    $region5: #{spatial_attention.1} parent=1 // loop_body
      %s13 = ssub.s32 %s8, 1
      %s14 = ssub.s32 %s8, 2
      %s21 = sadd.s32 1, %s16
      %p22 = scmp.ge.s32.totalorder %s21, 2
      %s23 = scalar_select %p22, 0, %s21
      %s24 = sadd.s32 1, %s15
      %s25 = scalar_select %p22, %s24, %s15
      %p26 = scmp.ge.s32.totalorder %s25, 2
      %s27 = scalar_select %p26, 0, %s25
      %s28 = ssub.s32 %s15, %s27
      %s29 = ssub.s32 %s16, %s23
      %s30 = sor.u32 %s28, %s29
      %p31 = scmp.eq.s32.totalorder %s30, 0
      %s33 = sadd.s32 %s32, 1
      %s34 = scalar_select %p31, %s32, %s33
      %p37 = pneg %p31
      %p38 = scmp.eq.s32.totalorder %s8, 3
      %p39 = por %p37, %p38
      %p40 = scmp.ne.s32.totalorder %s32, %s35
      %p41 = scmp.eq.s32.totalorder %s8, 0
      %p42 = por %p40, %p41
      %p43 = scmp.ne.s32.totalorder %s32, %s35
      %p44 = scmp.eq.s32.totalorder %s13, 3
      %p45 = por %p43, %p44
      %p46 = scmp.ne.s32.totalorder %s35, %s36
      %p47 = scmp.eq.s32.totalorder %s13, 0
      %p48 = por %p46, %p47
      %p49 = scmp.ne.s32.totalorder %s35, %s36
      %p50 = scmp.eq.s32.totalorder %s14, 3
      %p51 = por %p49, %p50
      %p53 = scmp.ne.s32.totalorder %s36, %s52
      %p54 = scmp.eq.s32.totalorder %s14, 0
      %p55 = por %p53, %p54
      %s57 = sadd.s32 %s56, 1
      %p60 = scmp.eq.s32.totalorder %s8, 3
      %p61 = scmp.ne.s32.totalorder %s56, %s58
      %p62 = scmp.eq.s32.totalorder %s8, 0
      %p63 = por %p61, %p62
      %p64 = scmp.ne.s32.totalorder %s56, %s58
      %p65 = scmp.eq.s32.totalorder %s13, 3
      %p66 = por %p64, %p65
      %p67 = scmp.ne.s32.totalorder %s58, %s59
      %p68 = scmp.eq.s32.totalorder %s13, 0
      %p69 = por %p67, %p68
      %p70 = scmp.ne.s32.totalorder %s58, %s59
      %p71 = scmp.eq.s32.totalorder %s14, 3
      %p72 = por %p70, %p71
      %p74 = scmp.ne.s32.totalorder %s59, %s73
      %p75 = scmp.eq.s32.totalorder %s14, 0
      %p76 = por %p74, %p75
      %s77 = ssub.s32 %s15, %s27
      %s78 = ssub.s32 %s16, %s23
      %s79 = sor.u32 %s77, %s78
      %p80 = scmp.eq.s32.totalorder %s79, 0
      %s82 = sadd.s32 %s81, 1
      %s83 = scalar_select %p80, %s81, %s82
      %p86 = pneg %p80
      %p87 = scmp.eq.s32.totalorder %s8, 3
      %p88 = por %p86, %p87
      %p89 = scmp.ne.s32.totalorder %s81, %s84
      %p90 = scmp.eq.s32.totalorder %s8, 0
      %p91 = por %p89, %p90
      %p92 = scmp.ne.s32.totalorder %s81, %s84
      %p93 = scmp.eq.s32.totalorder %s13, 3
      %p94 = por %p92, %p93
      %p95 = scmp.ne.s32.totalorder %s84, %s85
      %p96 = scmp.eq.s32.totalorder %s13, 0
      %p97 = por %p95, %p96
      %p98 = scmp.ne.s32.totalorder %s84, %s85
      %p99 = scmp.eq.s32.totalorder %s14, 3
      %p100 = por %p98, %p99
      %p102 = scmp.ne.s32.totalorder %s85, %s101
      %p103 = scmp.eq.s32.totalorder %s14, 0
      %p104 = por %p102, %p103
      %p105 = scmp.le.s32.totalorder 1, %s8
      %p106 = scmp.lt.s32.totalorder %s8, 5
      %p107 = pnand %p105, %p106
      %p108 = pneg %p107
      // Predicated region
      $region9: #{spatial_attention.1} parent=5 // pred_check
        _
      $region10: #{spatial_attention.1} parent=5 // pred_check_branch
        %110 = sbr.rel (%p107) target = $region12
      $region11: #{spatial_attention.1} parent=5 // pred_region
        %s111 = ssub.s32 %s8, 1
        // Predicated region
        $region13: #{spatial_attention.1} parent=11 // pred_check
          %p112 = pneg %p69
        $region14: #{spatial_attention.1} parent=11 // pred_check_branch
          %114 = sbr.rel (%p112) target = $region16
        $region15: #{spatial_attention.1} parent=11 // pred_region
          _
        $region16: #{spatial_attention.1} parent=11 // pred_fallthru
          _
      $region12: #{spatial_attention.1} parent=5 // pred_fallthru
        _
      %p115 = scmp.lt.s32.totalorder %s8, 4
      // Predicated region
      $region17: #{spatial_attention.1} parent=5 // pred_check
        %p116 = pneg %p115
      $region18: #{spatial_attention.1} parent=5 // pred_check_branch
        %118 = sbr.rel (%p116) target = $region20
      $region19: #{spatial_attention.1} parent=5 // pred_region
        // Predicated region
        $region21: #{spatial_attention.1} parent=19 // pred_check
          %p119 = pneg %p42
        $region22: #{spatial_attention.1} parent=19 // pred_check_branch
          %121 = sbr.rel (%p119) target = $region24
        $region23: #{spatial_attention.1} parent=19 // pred_region
          %s122 = sand.u32 %s32, 1
          %s123 = sand.u32 %s32, 1
          %s124 = smul.addr %s123, 52
          %s125 = scalar_lea.vmem [#allocation2], %s124
          %s126 = smul.addr %s15, 26
          %s127 = sadd.s32 %s16, %s126
          %s128 = smul.addr %s127, 4
          %s129 = scalar_lea.vmem %s0, %s128
          // Predicated region
          $region25: #{spatial_attention.1} parent=23 // pred_check
            _
          $region26: #{spatial_attention.1} parent=23 // pred_check_branch
            %131 = sbr.rel (0) target = $region28
          $region27: #{spatial_attention.1} parent=23 // pred_region
            // Predicated region
            $region29: #{spatial_attention.1} parent=27 // pred_check
              _
            $region30: #{spatial_attention.1} parent=27 // pred_check_branch
              %133 = sbr.rel target = $region32
            $region31: #{spatial_attention.1} parent=27 // pred_region
              // Predicated region
              $region44: #{spatial_attention.1} parent=31 // pred_check
                _
              $region45: #{spatial_attention.1} parent=31 // pred_check_branch
                %172 = sbr.rel (0) target = $region47
              $region46: #{spatial_attention.1} parent=31 // pred_region
                loop: start=0, step=1, limit=1
                $region48: #{spatial_attention.1} parent=46 // loop_pre_header
                  _
                $region49: #{spatial_attention.1} parent=46 // loop_header
                  %s174 = sphi 0, %s178
                  %p175 = scmp.ge.s32.totalorder %s174, 1
                  %s179 = sphi %s129, %s129
                  %s180 = sphi %s125, %s125
                $region50: #{spatial_attention.1} parent=46 // loop_header_branch
                  %177 = sbr.rel (%p175) target = $region54
                $region51: #{spatial_attention.1} parent=46 // loop_body
                  _
                $region52: #{spatial_attention.1} parent=46 // loop_footer
                  %s178 = sadd.s32 1, %s174
                $region53: #{spatial_attention.1} parent=46 // loop_footer_branch
                  %173 = sbr.rel target = $region49
                $region54: #{spatial_attention.1} parent=46 // loop_exit
                  _
                loop: start=0, step=1, limit=1
                $region55: #{spatial_attention.1} parent=46 // loop_pre_header
                  _
                $region56: #{spatial_attention.1} parent=46 // loop_header
                  %s183 = sphi 0, %s187
                  %p184 = scmp.ge.s32.totalorder %s183, 1
                  %s188 = sphi %s129, %s129
                  %s189 = sphi %s125, %s125
                $region57: #{spatial_attention.1} parent=46 // loop_header_branch
                  %186 = sbr.rel (%p184) target = $region61
                $region58: #{spatial_attention.1} parent=46 // loop_body
                  %v190 = vld [vmem:[%s188] sm:$0xf]
                  %191 = vst [vmem:[%s189] sm:$0xf] %v190
                  %v192 = vld [vmem:[%s188 + $0x8] sm:$0xf]
                  %193 = vst [vmem:[%s189 + $0x4] sm:$0xf] %v192
                  %v194 = vld [vmem:[%s188 + $0x10] sm:$0xf]
                  %195 = vst [vmem:[%s189 + $0x8] sm:$0xf] %v194
                  %v196 = vld [vmem:[%s188 + $0x18] sm:$0xf]
                  %197 = vst [vmem:[%s189 + $0xc] sm:$0xf] %v196
                  %v198 = vld [vmem:[%s188 + $0x20] sm:$0xf]
                  %199 = vst [vmem:[%s189 + $0x10] sm:$0xf] %v198
                  %v200 = vld [vmem:[%s188 + $0x28] sm:$0xf]
                  %201 = vst [vmem:[%s189 + $0x14] sm:$0xf] %v200
                  %v202 = vld [vmem:[%s188 + $0x30] sm:$0xf]
                  %203 = vst [vmem:[%s189 + $0x18] sm:$0xf] %v202
                  %v204 = vld [vmem:[%s188 + $0x38] sm:$0xf]
                  %205 = vst [vmem:[%s189 + $0x1c] sm:$0xf] %v204
                  %v206 = vld [vmem:[%s188 + $0x40] sm:$0xf]
                  %207 = vst [vmem:[%s189 + $0x20] sm:$0xf] %v206
                  %v208 = vld [vmem:[%s188 + $0x48] sm:$0xf]
                  %209 = vst [vmem:[%s189 + $0x24] sm:$0xf] %v208
                  %v210 = vld [vmem:[%s188 + $0x50] sm:$0xf]
                  %211 = vst [vmem:[%s189 + $0x28] sm:$0xf] %v210
                  %v212 = vld [vmem:[%s188 + $0x58] sm:$0xf]
                  %213 = vst [vmem:[%s189 + $0x2c] sm:$0xf] %v212
                  %v214 = vld [vmem:[%s188 + $0x60] sm:$0xf]
                  %215 = vst [vmem:[%s189 + $0x30] sm:$0xf] %v214
                $region59: #{spatial_attention.1} parent=46 // loop_footer
                  %s187 = sadd.s32 1, %s183
                $region60: #{spatial_attention.1} parent=46 // loop_footer_branch
                  %182 = sbr.rel target = $region56
                $region61: #{spatial_attention.1} parent=46 // loop_exit
                  _
              $region47: #{spatial_attention.1} parent=31 // pred_fallthru
                _
            $region32: #{spatial_attention.1} parent=27 // pred_fallthru
              _
            // Predicated region
            $region33: #{spatial_attention.1} parent=27 // pred_check
              _
            $region34: #{spatial_attention.1} parent=27 // pred_check_branch
              %135 = sbr.rel (0) target = $region36
            $region35: #{spatial_attention.1} parent=27 // pred_region
              loop: start=0, step=1, limit=1
              $region37: #{spatial_attention.1} parent=35 // loop_pre_header
                _
              $region38: #{spatial_attention.1} parent=35 // loop_header
                %s138 = sphi 0, %s142
                %p139 = scmp.ge.s32.totalorder %s138, 1
                %s143 = sphi %s129, %s129
                %s144 = sphi %s125, %s125
              $region39: #{spatial_attention.1} parent=35 // loop_header_branch
                %141 = sbr.rel (%p139) target = $region43
              $region40: #{spatial_attention.1} parent=35 // loop_body
                %v145 = vld [vmem:[%s143] sm:$0xf]
                %146 = vst [vmem:[%s144] sm:$0xf] %v145
                %v147 = vld [vmem:[%s143 + $0x8] sm:$0xf]
                %148 = vst [vmem:[%s144 + $0x4] sm:$0xf] %v147
                %v149 = vld [vmem:[%s143 + $0x10] sm:$0xf]
                %150 = vst [vmem:[%s144 + $0x8] sm:$0xf] %v149
                %v151 = vld [vmem:[%s143 + $0x18] sm:$0xf]
                %152 = vst [vmem:[%s144 + $0xc] sm:$0xf] %v151
                %v153 = vld [vmem:[%s143 + $0x20] sm:$0xf]
                %154 = vst [vmem:[%s144 + $0x10] sm:$0xf] %v153
                %v155 = vld [vmem:[%s143 + $0x28] sm:$0xf]
                %156 = vst [vmem:[%s144 + $0x14] sm:$0xf] %v155
                %v157 = vld [vmem:[%s143 + $0x30] sm:$0xf]
                %158 = vst [vmem:[%s144 + $0x18] sm:$0xf] %v157
                %v159 = vld [vmem:[%s143 + $0x38] sm:$0xf]
                %160 = vst [vmem:[%s144 + $0x1c] sm:$0xf] %v159
                %v161 = vld [vmem:[%s143 + $0x40] sm:$0xf]
                %162 = vst [vmem:[%s144 + $0x20] sm:$0xf] %v161
                %v163 = vld [vmem:[%s143 + $0x48] sm:$0xf]
                %164 = vst [vmem:[%s144 + $0x24] sm:$0xf] %v163
                %v165 = vld [vmem:[%s143 + $0x50] sm:$0xf]
                %166 = vst [vmem:[%s144 + $0x28] sm:$0xf] %v165
                %v167 = vld [vmem:[%s143 + $0x58] sm:$0xf]
                %168 = vst [vmem:[%s144 + $0x2c] sm:$0xf] %v167
                %v169 = vld [vmem:[%s143 + $0x60] sm:$0xf]
                %170 = vst [vmem:[%s144 + $0x30] sm:$0xf] %v169
              $region41: #{spatial_attention.1} parent=35 // loop_footer
                %s142 = sadd.s32 1, %s138
              $region42: #{spatial_attention.1} parent=35 // loop_footer_branch
                %137 = sbr.rel target = $region38
              $region43: #{spatial_attention.1} parent=35 // loop_exit
                _
            $region36: #{spatial_attention.1} parent=27 // pred_fallthru
              _
          $region28: #{spatial_attention.1} parent=23 // pred_fallthru
            _
          %216 = vnop
        $region24: #{spatial_attention.1} parent=19 // pred_fallthru
          _
      $region20: #{spatial_attention.1} parent=5 // pred_fallthru
        _
      %p217 = scmp.le.s32.totalorder 1, %s8
      %p218 = scmp.lt.s32.totalorder %s8, 5
      %p219 = pnand %p217, %p218
      %p220 = pneg %p219
      // Predicated region
      $region62: #{spatial_attention.1} parent=5 // pred_check
        _
      $region63: #{spatial_attention.1} parent=5 // pred_check_branch
        %222 = sbr.rel (%p219) target = $region65
      $region64: #{spatial_attention.1} parent=5 // pred_region
        %s223 = ssub.s32 %s8, 1
        %s224 = sand.u32 %s35, 1
        %s225 = sand.u32 %s35, 1
        %s226 = smul.addr %s225, 52
        %s227 = scalar_lea.vmem [#allocation2], %s226
        // Predicated region
        $region66: #{spatial_attention.1} parent=64 // pred_check
          %p228 = pneg %p48
        $region67: #{spatial_attention.1} parent=64 // pred_check_branch
          %230 = sbr.rel (%p228) target = $region69
        $region68: #{spatial_attention.1} parent=64 // pred_region
          _
        $region69: #{spatial_attention.1} parent=64 // pred_fallthru
          _
        %s231 = sand.u32 %s35, 1
        %s232 = sand.u32 %s35, 1
        %s233 = smul.addr %s232, 52
        %s234 = scalar_lea.vmem [#allocation2], %s233
        %p235 = pneg %p48
        %p236 = pneg %p45
        %p237 = pneg %p69
        %p238 = pneg %p66
        %p239 = pneg %p97
        %p240 = pneg %p94
        %p241 = scmp.lt.s32.totalorder %s17, 1
        %s242 = scalar_select %p241, %s17, 1
        %p243 = scmp.lt.s32.totalorder %s18, 1
        %s244 = scalar_select %p243, %s18, 1
        %s245 = smul.addr %s242, 2
        %s246 = sadd.s32 %s244, %s245
        %s247 = scalar_lea.vmem %s2, %s246
        %p248 = scmp.lt.s32.totalorder %s17, 1
        %s249 = scalar_select %p248, %s17, 1
        %p250 = scmp.lt.s32.totalorder %s18, 1
        %s251 = scalar_select %p250, %s18, 1
        %s252 = smul.addr %s249, 2
        %s253 = sadd.s32 %s251, %s252
        %s254 = scalar_lea.vmem %s2, %s253
        %v256 = vld [vmem:[%s1] sm:$0x1]
        %v257 = vld [vmem:[%s227] sm:$0xf]
        %v258 = vld [vmem:[%s227 + $0x4] sm:$0xf]
        %v259 = vld [vmem:[%s227 + $0x8] sm:$0xf]
        %v260 = vld [vmem:[%s227 + $0xc] sm:$0xf]
        %v261 = vld [vmem:[%s227 + $0x10] sm:$0xf]
        %v262 = vld [vmem:[%s227 + $0x14] sm:$0xf]
        %v263 = vld [vmem:[%s227 + $0x18] sm:$0xf]
        %v264 = vld [vmem:[%s227 + $0x1c] sm:$0xf]
        %v265 = vld [vmem:[%s227 + $0x20] sm:$0xf]
        %v266 = vld [vmem:[%s227 + $0x24] sm:$0xf]
        %v267 = vld [vmem:[%s227 + $0x28] sm:$0xf]
        %v268 = vld [vmem:[%s227 + $0x2c] sm:$0xf]
        %v269 = vld [vmem:[%s227 + $0x30] sm:$0x1]
        %v283 = vunpack.c.l.b16 %v257
        %v284 = vunpack.c.l.b16 %v258
        %v285 = vunpack.c.l.b16 %v259
        %v286 = vunpack.c.l.b16 %v260
        %v287 = vunpack.c.l.b16 %v261
        %v288 = vunpack.c.l.b16 %v262
        %v289 = vunpack.c.l.b16 %v263
        %v290 = vunpack.c.l.b16 %v264
        %v291 = vunpack.c.l.b16 %v265
        %v292 = vunpack.c.l.b16 %v266
        %v293 = vunpack.c.l.b16 %v267
        %v294 = vunpack.c.l.b16 %v268
        %v295 = vunpack.c.l.b16 %v269
        %v296 = vpack.c.b16 %v284, %v283
        %v297 = vpack.c.b16 %v286, %v285
        %v298 = vpack.c.b16 %v288, %v287
        %v299 = vpack.c.b16 %v290, %v289
        %v300 = vpack.c.b16 %v292, %v291
        %v301 = vpack.c.b16 %v294, %v293
        %v302 = vpack.c.b16 %v295, %v295
        %vm309 = vcmask 801792
        %v311 = vsel %vm309, %v256, 0
        %vm313 = vcmask 1040384
        %v315 = vsel %vm313, %v302, 0
        %317 = vmatprep.subr.bf16.mxu0 0
        %318 = vmatpush1.bf16.msra.mxu0 %v296
        %319 = vmatprep.subr.bf16.mxu0 0
        %320 = vmatpush1.bf16.msra.mxu0 %v297
        %321 = vmatprep.subr.bf16.mxu0 0
        %322 = vmatpush1.bf16.msra.mxu0 %v298
        %323 = vmatprep.subr.bf16.mxu0 0
        %324 = vmatpush1.bf16.msra.mxu0 %v299
        %325 = vmatprep.subr.bf16.mxu0 0
        %326 = vmatpush1.bf16.msra.mxu0 %v300
        %327 = vmatprep.subr.bf16.mxu0 0
        %328 = vmatpush1.bf16.msra.mxu0 %v301
        %329 = vmatprep.subr.bf16.mxu0 0
        %330 = vmatpush1.bf16.msra.mxu0 %v315
        %331 = vmatprep.subr.bf16.mxu0 0
        %332 = vmatpush1.bf16.msra.mxu0 0
        %333 = vmatprep.subr.bf16.mxu0 0
        %334 = vmatpush1.bf16.msra.mxu0 0
        %335 = vmatprep.subr.bf16.mxu0 0
        %336 = vmatpush1.bf16.msra.mxu0 0
        %337 = vmatprep.subr.bf16.mxu0 0
        %338 = vmatpush1.bf16.msra.mxu0 0
        %339 = vmatprep.subr.bf16.mxu0 0
        %340 = vmatpush1.bf16.msra.mxu0 0
        %341 = vmatprep.subr.bf16.mxu0 0
        %342 = vmatpush1.bf16.msra.mxu0 0
        %343 = vmatprep.subr.bf16.mxu0 0
        %344 = vmatpush1.bf16.msra.mxu0 0
        %345 = vmatprep.subr.bf16.mxu0 0
        %346 = vmatpush1.bf16.msra.mxu0 0
        %347 = vmatprep.subr.bf16.mxu0 0
        %348 = vmatpush1.bf16.msra.mxu0 0
        %349 = vmatprep.mubr.bf16.mxu0 0
        %350 = vmatmul.mubr.bf16.gmra.mrb[0].mxu0 %v311
        %v351 = vpop.f32.mrb[0].mxu0
        %v352 = vadd.f32 0.0, %v351
        %v353 = vpop.f32.mrb[0].mxu0
        %v354 = vpop.f32.mrb[0].mxu0
        %v355 = vpop.f32.mrb[0].mxu0
        %356 = vdwg.mxu0
        %v357 = vsub.f32 0.0, %v352
        %v358 = vmul.f32 %v357, 1.442695
        %v359 = vpow.pop %v358
        %v360 = vadd.f32 %v359, 1.0
        %v361 = vrcp.pop %v360
        %362 = vst [vmem:[%s254] sm:$0x1] %v361
        %p363 = scmp.lt.s32.totalorder %s17, 1
        %s364 = scalar_select %p363, %s17, 1
        %p365 = scmp.lt.s32.totalorder %s18, 1
        %s366 = scalar_select %p365, %s18, 1
        %s367 = smul.addr %s364, 2
        %s368 = sadd.s32 %s366, %s367
        %s369 = scalar_lea.vmem %s2, %s368
        // Predicated region
        $region70: #{spatial_attention.1} parent=64 // pred_check
          %p370 = pneg %p94
        $region71: #{spatial_attention.1} parent=64 // pred_check_branch
          %372 = sbr.rel (%p370) target = $region73
        $region72: #{spatial_attention.1} parent=64 // pred_region
          _
        $region73: #{spatial_attention.1} parent=64 // pred_fallthru
          _
      $region65: #{spatial_attention.1} parent=5 // pred_fallthru
        _
      %p373 = scmp.le.s32.totalorder 2, %s8
      // Predicated region
      $region74: #{spatial_attention.1} parent=5 // pred_check
        %p374 = pneg %p373
      $region75: #{spatial_attention.1} parent=5 // pred_check_branch
        %376 = sbr.rel (%p374) target = $region77
      $region76: #{spatial_attention.1} parent=5 // pred_region
        %s377 = ssub.s32 %s8, 2
        // Predicated region
        $region78: #{spatial_attention.1} parent=76 // pred_check
          %p378 = pneg %p100
        $region79: #{spatial_attention.1} parent=76 // pred_check_branch
          %380 = sbr.rel (%p378) target = $region81
        $region80: #{spatial_attention.1} parent=76 // pred_region
          %p381 = scmp.lt.s32.totalorder %s19, 1
          %s382 = scalar_select %p381, %s19, 1
          %p383 = scmp.lt.s32.totalorder %s20, 1
          %s384 = scalar_select %p383, %s20, 1
          %s385 = smul.addr %s382, 2
          %s386 = sadd.s32 %s384, %s385
          %s387 = scalar_lea.vmem %s2, %s386
        $region81: #{spatial_attention.1} parent=76 // pred_fallthru
          _
      $region77: #{spatial_attention.1} parent=5 // pred_fallthru
        _
    $region6: #{spatial_attention.1} parent=1 // loop_footer
      %s12 = sadd.s32 1, %s8
    $region7: #{spatial_attention.1} parent=1 // loop_footer_branch
      %7 = sbr.rel target = $region3
    $region8: #{spatial_attention.1} parent=1 // loop_exit
      _

</llo_original>
